<compile_context>
chip_gen: v6e
topology: v6e:2x2x1
jax: 0.10.0
libtpu: 0.0.40
codegen_flags: <defaults>
</compile_context>

<pallas_src>
import functools

import jax
import jax.numpy as jnp
from jax.experimental import pallas as pl
from jax.experimental.pallas import tpu as pltpu

GAMMA = 2.0
ALPHA = 0.25

LANES = 128            # vreg lane width (last dim of every block)
MAX_TILE_ROWS = 4096   # (4096,128) f32 tile = 2 MiB per input per grid step
MAX_ACC_ROWS = 32      # up to 4 independent (8,128) vreg accumulation chains
NUM_CORES = 2          # v7x has 2 TensorCores; harmless on 1-TC v5e/v6e


def _round_up(x, m):
    return (x + m - 1) // m * m


def _pow_gamma(t, gamma):
    """(1 - p_t)**gamma with a cheap/NaN-safe path for the common cases."""
    if gamma == 2.0:
        return t * t                      # single VPU mul, no exp/log
    if float(gamma).is_integer() and gamma >= 1:
        return jax.lax.integer_pow(t, int(gamma))
    return jnp.maximum(t, 0.0) ** gamma   # clamp avoids log(negative) NaN


def _focal_loss_kernel(pred_ref, true_ref, out_ref, acc_ref, *,
                       gamma, alpha, n_rows_valid, tile_rows, acc_rows,
                       tiles_per_core, needs_mask, approx):
    c = pl.program_id(0)   # core / partial-sum slot ("parallel" axis)
    i = pl.program_id(1)   # this core's row tiles ("arbitrary" reduction axis)

    @pl.when(i == 0)
    def _():
        acc_ref[...] = jnp.zeros_like(acc_ref)

    x = pred_ref[...].astype(jnp.float32)
    y = true_ref[...].astype(jnp.float32)

    # Numerically stable BCE-with-logits sharing a single exp with the sigmoid:
    #   bce = max(x,0) - x*y + log1p(e),  e = exp(-|x|)
    #   p   = sigmoid(x) = 1/(1+e)  for x>=0,   e/(1+e)  for x<0
    e = jnp.exp(-jnp.abs(x))
    bce = jnp.maximum(x, 0.0) - x * y + jnp.log1p(e)
    if approx:
        inv = pl.reciprocal(1.0 + e, approx=True)   # EUP slot, off the VALU
    else:
        inv = 1.0 / (1.0 + e)
    p = jnp.where(x >= 0.0, inv, e * inv)

    # Algebraic simplification (fewer VPU ops, identical math):
    #   t       = 1 - p_t          = y + p - 2*y*p
    #   alpha_f = y*a + (1-y)(1-a) = (1-a) + (2a-1)*y
    t = y + p - 2.0 * (y * p)
    alpha_factor = (1.0 - alpha) + (2.0 * alpha - 1.0) * y
    focal = bce * alpha_factor * _pow_gamma(t, gamma)

    groups = tile_rows // acc_rows

    def accumulate(v):
        # Vreg-shaped accumulation with VPU adds only; acc_rows up to 32 gives
        # several independent per-lane chains (ILP).  The expensive cross-lane
        # reduce + divide happen once, outside the kernel.
        acc_ref[...] += v.reshape(groups, acc_rows, LANES).sum(axis=0)

    if needs_mask:
        # Only the final (partial / duplicated) tile pays for the mask.
        block = c * tiles_per_core + i               # unclamped logical block idx
        block_row0 = block * tile_rows
        is_partial = block_row0 + tile_rows > n_rows_valid

        @pl.when(jnp.logical_not(is_partial))
        def _():
            accumulate(focal)

        @pl.when(is_partial)
        def _():
            row = block_row0 + jax.lax.broadcasted_iota(
                jnp.int32, (tile_rows, LANES), 0)
            accumulate(jnp.where(row < n_rows_valid, focal, 0.0))
    else:
        accumulate(focal)

    @pl.when(i == pl.num_programs(1) - 1)
    def _():
        out_ref[...] = acc_ref[...]


def _focal_elementwise(x, y, gamma, alpha):
    """Plain-JAX focal loss (used for the tiny <128-element flat tail)."""
    x = x.astype(jnp.float32)
    y = y.astype(jnp.float32)
    e = jnp.exp(-jnp.abs(x))
    bce = jnp.maximum(x, 0.0) - x * y + jnp.log1p(e)
    inv = 1.0 / (1.0 + e)
    p = jnp.where(x >= 0.0, inv, e * inv)
    t = y + p - 2.0 * (y * p)
    alpha_factor = (1.0 - alpha) + (2.0 * alpha - 1.0) * y
    return bce * alpha_factor * _pow_gamma(t, gamma)


def focal_loss(pred, true, gamma=GAMMA, alpha=ALPHA, approx_reciprocal=True):
    """Mean focal loss over all elements. pred/true: same (arbitrary) shape, any
    float dtype (cast to f32 inside VMEM; no wrapper-side cast / pad passes).

    approx_reciprocal=True uses the EUP approximate reciprocal for sigmoid
    (faster on VALU-bound v6e/v7x, ~1e-4-level relative error); set False for
    bit-tight agreement with the exact formula.
    """
    assert pred.shape == true.shape
    gamma = float(gamma)
    alpha = float(alpha)
    n = int(pred.size)

    pred_flat = pred.reshape(-1)   # contiguous reshape: free (bitcast)
    true_flat = true.reshape(-1)

    rows = n // LANES
    if rows < 8:                   # too small for an (8,128) block: all plain-JAX
        rows = 0
    bulk = rows * LANES
    tail = n - bulk

    total = jnp.zeros((), jnp.float32)

    if rows > 0:
        if tail:
            # Prefix slice only in the ragged case (no full-tensor pad, no cast).
            pred2d = jax.lax.slice(pred_flat, (0,), (bulk,)).reshape(rows, LANES)
            true2d = jax.lax.slice(true_flat, (0,), (bulk,)).reshape(rows, LANES)
        else:
            pred2d = pred_flat.reshape(rows, LANES)
            true2d = true_flat.reshape(rows, LANES)

        # Per-core tile height: multiple of 8 (f32 sublane tile), capped for VMEM.
        tile_rows = min(MAX_TILE_ROWS, _round_up(pl.cdiv(rows, NUM_CORES), 8))
        n_blocks = pl.cdiv(rows, tile_rows)
        tiles_per_core = pl.cdiv(n_blocks, NUM_CORES)
        acc_rows = (MAX_ACC_ROWS if tile_rows % MAX_ACC_ROWS == 0
                    else (16 if tile_rows % 16 == 0 else 8))
        # Mask needed only if the last block is partial or a grid step duplicates
        # (clamped index) the last block when n_blocks isn't a multiple of NUM_CORES.
        needs_mask = (rows % tile_rows != 0) or (NUM_CORES * tiles_per_core != n_blocks)
        last_block = n_blocks - 1

        def in_index_map(c, i, _tpc=tiles_per_core, _last=last_block):
            # Clamp so a duplicated trailing step re-reads the last valid block
            # (its contribution is fully masked to zero inside the kernel).
            return (jnp.minimum(c * _tpc + i, _last), 0)

        kernel = functools.partial(
            _focal_loss_kernel,
            gamma=gamma, alpha=alpha, n_rows_valid=rows,
            tile_rows=tile_rows, acc_rows=acc_rows,
            tiles_per_core=tiles_per_core, needs_mask=needs_mask,
            approx=bool(approx_reciprocal),
        )

        out_bytes = NUM_CORES * acc_rows * LANES * 4
        cost = pl.CostEstimate(
            flops=22 * bulk,
            transcendentals=3 * bulk,              # exp, log1p, reciprocal
            bytes_accessed=int(pred2d.size * pred2d.dtype.itemsize
                               + true2d.size * true2d.dtype.itemsize
                               + out_bytes),
        )

        partials = pl.pallas_call(
            kernel,
            out_shape=jax.ShapeDtypeStruct((NUM_CORES * acc_rows, LANES), jnp.float32),
            grid_spec=pltpu.PrefetchScalarGridSpec(
                num_scalar_prefetch=0,
                grid=(NUM_CORES, tiles_per_core),
                in_specs=[
                    pl.BlockSpec((tile_rows, LANES), in_index_map),
                    pl.BlockSpec((tile_rows, LANES), in_index_map),
                ],
                out_specs=pl.BlockSpec((acc_rows, LANES), lambda c, i: (c, 0)),
                scratch_shapes=[pltpu.VMEM((acc_rows, LANES), jnp.float32)],
            ),
            compiler_params=pltpu.CompilerParams(
                dimension_semantics=("parallel", "arbitrary"),
                vmem_limit_bytes=48 * 1024 * 1024,
            ),
            cost_estimate=cost,
        )(pred2d, true2d)

        total = total + partials.sum()

    if tail:
        # <128-element (or sub-1K tiny-input) flat tail: negligible plain-JAX op.
        xt = jax.lax.slice(pred_flat, (bulk,), (n,))
        yt = jax.lax.slice(true_flat, (bulk,), (n,))
        total = total + _focal_elementwise(xt, yt, gamma, alpha).sum()

    return total / n


def _reference_focal_loss(pred, true, gamma=GAMMA, alpha=ALPHA):
    x = pred.astype(jnp.float32)
    y = true.astype(jnp.float32)
    bce = jnp.maximum(x, 0.0) - x * y + jnp.log1p(jnp.exp(-jnp.abs(x)))
    p = jax.nn.sigmoid(x)
    p_t = y * p + (1.0 - y) * (1.0 - p)
    af = y * alpha + (1.0 - y) * (1.0 - alpha)
    mod = (1.0 - p_t) ** gamma
    return jnp.mean(bce * af * mod)


if __name__ == "__main__":
    key = jax.random.PRNGKey(0)
    k1, k2, k3, k4 = jax.random.split(key, 4)

    # Small NCHW-shaped inputs: batch=2, channels=4, spatial=16x16
    B, C, H, W = 2, 4, 16, 16
    pred = jax.random.normal(k1, (B, C, H, W), dtype=jnp.float32) * 2.0
    true = (jax.random.uniform(k2, (B, C, H, W)) > 0.5).astype(jnp.float32)
    ref = _reference_focal_loss(pred, true)

    # Exact-reciprocal path: tight check against the pure-JAX reference.
    out_exact = jax.block_until_ready(focal_loss(pred, true, approx_reciprocal=False))
    assert jnp.allclose(out_exact, ref, rtol=1e-5, atol=1e-6), (out_exact, ref)

    # Default fast path (EUP approximate reciprocal): loose tolerance for the approx op.
    out_fast = jax.block_until_ready(focal_loss(pred, true))
    assert jnp.allclose(out_fast, ref, rtol=1e-2, atol=1e-5), (out_fast, ref)

    # Ragged shape: exercises the un-padded partial block, the pl.when-gated
    # in-kernel validity mask and the plain-JAX flat tail.
    pred2 = jax.random.normal(k3, (2, 3, 17, 19), dtype=jnp.float32) * 3.0
    true2 = (jax.random.uniform(k4, (2, 3, 17, 19)) > 0.5).astype(jnp.float32)
    ref2 = _reference_focal_loss(pred2, true2)
    out2_exact = jax.block_until_ready(focal_loss(pred2, true2, approx_reciprocal=False))
    assert jnp.allclose(out2_exact, ref2, rtol=1e-5, atol=1e-6), (out2_exact, ref2)
    out2_fast = jax.block_until_ready(focal_loss(pred2, true2))
    assert jnp.allclose(out2_fast, ref2, rtol=1e-2, atol=1e-5), (out2_fast, ref2)

    print("KERNEL_OK")
</pallas_src>

<mosaic_0001>
module attributes {stable_mosaic.version = 11 : i64} {
  func.func @_focal_loss_kernel(%arg0: i32, %arg1: i32, %arg2: memref<8x128xf32, #tpu.memory_space<vmem>>, %arg3: memref<8x128xf32, #tpu.memory_space<vmem>>, %arg4: memref<8x128xf32, #tpu.memory_space<vmem>>, %arg5: memref<8x128xf32, #tpu.memory_space<vmem>>) attributes {dimension_semantics = [#tpu.dimension_semantics<parallel>, #tpu.dimension_semantics<arbitrary>], iteration_bounds = array<i64: 2, 1>, scalar_prefetch = 0 : i64, scratch_operands = 1 : i64, tpu.core_type = #tpu.core_type<tc>, window_params = [{transform_indices = @transform_0, window_bounds = array<i64: 8, 128>}, {transform_indices = @transform_1, window_bounds = array<i64: 8, 128>}, {transform_indices = @transform_2, window_bounds = array<i64: 8, 128>}]} {
    %c0_i32 = arith.constant 0 : i32
    %0 = arith.cmpi eq, %arg1, %c0_i32 : i32
    %1 = arith.extui %0 : i1 to i32
    %c0_i32_0 = arith.constant 0 : i32
    %2 = arith.cmpi ne, %1, %c0_i32_0 : i32
    scf.if %2 {
      %cst_18 = arith.constant 0.000000e+00 : f32
      %43 = vector.broadcast %cst_18 : f32 to vector<8x128xf32>
      %c0_19 = arith.constant 0 : index
      %c0_20 = arith.constant 0 : index
      %44 = vector.load %arg5[%c0_19, %c0_20] : memref<8x128xf32, #tpu.memory_space<vmem>>, vector<8x128xf32>
      tpu.vector_store %arg5[%c0_19, %c0_20], %43 {strides = array<i32>} : memref<8x128xf32, #tpu.memory_space<vmem>>, vector<8x128xf32>,
    } else {
    }
    %c0 = arith.constant 0 : index
    %c0_1 = arith.constant 0 : index
    %3 = vector.load %arg2[%c0, %c0_1] : memref<8x128xf32, #tpu.memory_space<vmem>>, vector<8x128xf32>
    %c0_2 = arith.constant 0 : index
    %c0_3 = arith.constant 0 : index
    %4 = vector.load %arg3[%c0_2, %c0_3] : memref<8x128xf32, #tpu.memory_space<vmem>>, vector<8x128xf32>
    %5 = math.absf %3 : vector<8x128xf32>
    %cst = arith.constant 0.000000e+00 : f32
    %6 = vector.broadcast %cst : f32 to vector<8x128xf32>
    %7 = arith.subf %6, %5 : vector<8x128xf32>
    %8 = math.exp %7 : vector<8x128xf32>
    %cst_4 = arith.constant 0.000000e+00 : f32
    %9 = vector.broadcast %cst_4 : f32 to vector<8x128xf32>
    %10 = arith.maximumf %3, %9 : vector<8x128xf32>
    %11 = arith.mulf %3, %4 : vector<8x128xf32>
    %12 = arith.subf %10, %11 : vector<8x128xf32>
    %13 = math.log1p %8 : vector<8x128xf32>
    %14 = arith.addf %12, %13 : vector<8x128xf32>
    %cst_5 = arith.constant 1.000000e+00 : f32
    %15 = vector.broadcast %cst_5 : f32 to vector<8x128xf32>
    %16 = arith.addf %15, %8 : vector<8x128xf32>
    %cst_6 = arith.constant 1.000000e+00 : f32
    %17 = vector.broadcast %cst_6 : f32 to vector<8x128xf32>
    %18 = arith.divf %17, %16 : vector<8x128xf32>
    %cst_7 = arith.constant 0.000000e+00 : f32
    %19 = vector.broadcast %cst_7 : f32 to vector<8x128xf32>
    %20 = arith.cmpf oge, %3, %19 : vector<8x128xf32>
    %21 = arith.mulf %8, %18 : vector<8x128xf32>
    %22 = arith.select %20, %18, %21 : vector<8x128xi1>, vector<8x128xf32>
    %23 = arith.addf %4, %22 : vector<8x128xf32>
    %24 = arith.mulf %4, %22 : vector<8x128xf32>
    %cst_8 = arith.constant 2.000000e+00 : f32
    %25 = vector.broadcast %cst_8 : f32 to vector<8x128xf32>
    %26 = arith.mulf %25, %24 : vector<8x128xf32>
    %27 = arith.subf %23, %26 : vector<8x128xf32>
    %cst_9 = arith.constant -5.000000e-01 : f32
    %28 = vector.broadcast %cst_9 : f32 to vector<8x128xf32>
    %29 = arith.mulf %28, %4 : vector<8x128xf32>
    %cst_10 = arith.constant 7.500000e-01 : f32
    %30 = vector.broadcast %cst_10 : f32 to vector<8x128xf32>
    %31 = arith.addf %30, %29 : vector<8x128xf32>
    %32 = arith.mulf %14, %31 : vector<8x128xf32>
    %33 = arith.mulf %27, %27 : vector<8x128xf32>
    %34 = arith.mulf %32, %33 : vector<8x128xf32>
    %c0_11 = arith.constant 0 : index
    %c0_12 = arith.constant 0 : index
    %35 = vector.load %arg5[%c0_11, %c0_12] : memref<8x128xf32, #tpu.memory_space<vmem>>, vector<8x128xf32>
    %36 = vector.shape_cast %34 : vector<8x128xf32> to vector<1x8x128xf32>
    %cst_13 = arith.constant dense<0.000000e+00> : vector<8x128xf32>
    %37 = vector.multi_reduction <add>, %36, %cst_13 [0] : vector<1x8x128xf32> to vector<8x128xf32>
    %38 = arith.addf %35, %37 : vector<8x128xf32>
    %c0_14 = arith.constant 0 : index
    %c0_15 = arith.constant 0 : index
    %39 = vector.load %arg5[%c0_14, %c0_15] : memref<8x128xf32, #tpu.memory_space<vmem>>, vector<8x128xf32>
    tpu.vector_store %arg5[%c0_14, %c0_15], %38 {strides = array<i32>} : memref<8x128xf32, #tpu.memory_space<vmem>>, vector<8x128xf32>,
    %c0_i32_16 = arith.constant 0 : i32
    %40 = arith.cmpi eq, %arg1, %c0_i32_16 : i32
    %41 = arith.extui %40 : i1 to i32
    %c0_i32_17 = arith.constant 0 : i32
    %42 = arith.cmpi ne, %41, %c0_i32_17 : i32
    scf.if %42 {
      %c0_18 = arith.constant 0 : index
      %c0_19 = arith.constant 0 : index
      %43 = vector.load %arg5[%c0_18, %c0_19] : memref<8x128xf32, #tpu.memory_space<vmem>>, vector<8x128xf32>
      %c0_20 = arith.constant 0 : index
      %c0_21 = arith.constant 0 : index
      %44 = vector.load %arg4[%c0_20, %c0_21] : memref<8x128xf32, #tpu.memory_space<vmem>>, vector<8x128xf32>
      tpu.vector_store %arg4[%c0_20, %c0_21], %43 {strides = array<i32>} : memref<8x128xf32, #tpu.memory_space<vmem>>, vector<8x128xf32>,
    } else {
    }
    return
  }
  func.func @transform_0(%arg0: i32, %arg1: i32) -> (i32, i32) {
    %c1_i32 = arith.constant 1 : i32
    %0 = arith.muli %arg0, %c1_i32 : i32
    %1 = arith.addi %0, %arg1 : i32
    %c1_i32_0 = arith.constant 1 : i32
    %2 = arith.minsi %1, %c1_i32_0 : i32
    %c0_i32 = arith.constant 0 : i32
    %c0_i32_1 = arith.constant 0 : i32
    return %2, %c0_i32 : i32, i32
  }
  func.func @transform_1(%arg0: i32, %arg1: i32) -> (i32, i32) {
    %c1_i32 = arith.constant 1 : i32
    %0 = arith.muli %arg0, %c1_i32 : i32
    %1 = arith.addi %0, %arg1 : i32
    %c1_i32_0 = arith.constant 1 : i32
    %2 = arith.minsi %1, %c1_i32_0 : i32
    %c0_i32 = arith.constant 0 : i32
    %c0_i32_1 = arith.constant 0 : i32
    return %2, %c0_i32 : i32, i32
  }
  func.func @transform_2(%arg0: i32, %arg1: i32) -> (i32, i32) {
    %c0_i32 = arith.constant 0 : i32
    %c0_i32_0 = arith.constant 0 : i32
    return %arg0, %c0_i32 : i32, i32
  }
}

</mosaic_0001>

<llo_original>
// kernel: tpu_custom_call.1
$region0: #{tpu_custom_call.1}
  #allocation0 [shape = 'u32[]', space=smem, size = 0x4, offset = 0x4, fixed_abs, tag = 'smem constant byte address 0x4 - core index']
  #allocation1 [shape = 'u32[144,128]{1,0:T(1,128)}', space=vmem, size = 0x12000, scoped, tag = 'internal scratch']
  #allocation2 [shape = 'f32[8,128]{1,0:T(8,128)}', space=vmem, size = 0x1000, scoped, tag = 'scratch operand']
  %s0 = inlined_call_operand.hbm [shape: f32[16,128], index: 0, kind: input, shape index: {}]
  %s1 = inlined_call_operand.hbm [shape: f32[16,128], index: 1, kind: input, shape index: {}]
  %s2 = inlined_call_operand.hbm [shape: f32[16,128], index: 2, kind: output, shape index: {}]
  %s3 = sld [smem:[#allocation0]]
  $region57: #{tpu_custom_call.1} parent=0
    _
  %s5 = ssub.s32 1, %s3
  %s6 = scalar_select 0, %s5, %s3
  $region1: #{tpu_custom_call.1} parent=0
    #allocation3 [shape = 'u8[8192]{0}', space=vmem, size = 0x2000, scoped, tag = 'input window, operand 0']
    #allocation4 [shape = 's32[2]{0}', space=sflag, size = 0x8, scoped, tag = 'scoped memory for tpu_custom_call.1']
    #allocation5 [shape = 's32[2]{0}', space=sflag, size = 0x8, scoped, tag = 'scoped memory for tpu_custom_call.1']
    #allocation6 [shape = 'u8[8192]{0}', space=vmem, size = 0x2000, scoped, tag = 'input window, operand 1']
    #allocation7 [shape = 's32[2]{0}', space=sflag, size = 0x8, scoped, tag = 'scoped memory for tpu_custom_call.1']
    #allocation8 [shape = 'u8[8192]{0}', space=vmem, size = 0x2000, scoped, tag = 'output window, operand 0']
    %7 = vsyncpa [#allocation4], 0
    %s8 = scalar_lea.sflag [#allocation4], 1
    %9 = vsyncpa %s8, 0
    %10 = vsyncpa [#allocation7], 0
    %s11 = scalar_lea.sflag [#allocation7], 1
    %12 = vsyncpa %s11, 0
    %13 = vsyncpa [#allocation5], 0
    %s14 = scalar_lea.sflag [#allocation5], 1
    %15 = vsyncpa %s14, 0
    loop: start=0, step=1, limit=4
    $region2: #{tpu_custom_call.1} parent=1 // loop_pre_header
      _
    $region3: #{tpu_custom_call.1} parent=1 // loop_header
      %s17 = sphi 0, %s21
      %p18 = scmp.ge.s32.totalorder %s17, 4
      %s24 = sphi 0, %s36
      %s25 = sphi 0, %s32
      %s26 = sphi 0, %s24
      %s27 = sphi 0, %s25
      %s28 = sphi 0, %s26
      %s29 = sphi 0, %s27
      %s45 = sphi 0, %s47
      %s48 = sphi 0, %s45
      %s49 = sphi 0, %s48
      %s65 = sphi 0, %s49
      %s77 = sphi 0, %s79
      %s80 = sphi 0, %s77
      %s81 = sphi 0, %s80
      %s97 = sphi 0, %s81
      %s103 = sphi 0, %s105
      %s106 = sphi 0, %s103
      %s107 = sphi 0, %s106
      %s123 = sphi 0, %s107
    $region4: #{tpu_custom_call.1} parent=1 // loop_header_branch
      %20 = sbr.rel (%p18) target = $region8
    $region5: #{tpu_custom_call.1} parent=1 // loop_body
      %s22 = ssub.s32 %s17, 1
      %s23 = ssub.s32 %s17, 2
      %s30 = sadd.s32 1, %s25
      %p31 = scmp.ge.s32.totalorder %s30, 1
      %s32 = scalar_select %p31, 0, %s30
      %s33 = sadd.s32 1, %s24
      %s34 = scalar_select %p31, %s33, %s24
      %p35 = scmp.ge.s32.totalorder %s34, 2
      %s36 = scalar_select %p35, 0, %s34
      %s37 = sadd.s32 %s24, %s25
      %p38 = scmp.lt.s32.totalorder %s37, 1
      %s39 = scalar_select %p38, %s37, 1
      %s40 = sadd.s32 %s36, %s32
      %p41 = scmp.lt.s32.totalorder %s40, 1
      %s42 = scalar_select %p41, %s40, 1
      %s43 = ssub.s32 %s39, %s42
      %p44 = scmp.eq.s32.totalorder %s43, 0
      %s46 = sadd.s32 %s45, 1
      %s47 = scalar_select %p44, %s45, %s46
      %p50 = pneg %p44
      %p51 = scmp.eq.s32.totalorder %s17, 1
      %p52 = por %p50, %p51
      %p53 = scmp.ne.s32.totalorder %s45, %s48
      %p54 = scmp.eq.s32.totalorder %s17, 0
      %p55 = por %p53, %p54
      %p56 = scmp.ne.s32.totalorder %s45, %s48
      %p57 = scmp.eq.s32.totalorder %s22, 1
      %p58 = por %p56, %p57
      %p59 = scmp.ne.s32.totalorder %s48, %s49
      %p60 = scmp.eq.s32.totalorder %s22, 0
      %p61 = por %p59, %p60
      %p62 = scmp.ne.s32.totalorder %s48, %s49
      %p63 = scmp.eq.s32.totalorder %s23, 1
      %p64 = por %p62, %p63
      %p66 = scmp.ne.s32.totalorder %s49, %s65
      %p67 = scmp.eq.s32.totalorder %s23, 0
      %p68 = por %p66, %p67
      %s69 = sadd.s32 %s24, %s25
      %p70 = scmp.lt.s32.totalorder %s69, 1
      %s71 = scalar_select %p70, %s69, 1
      %s72 = sadd.s32 %s36, %s32
      %p73 = scmp.lt.s32.totalorder %s72, 1
      %s74 = scalar_select %p73, %s72, 1
      %s75 = ssub.s32 %s71, %s74
      %p76 = scmp.eq.s32.totalorder %s75, 0
      %s78 = sadd.s32 %s77, 1
      %s79 = scalar_select %p76, %s77, %s78
      %p82 = pneg %p76
      %p83 = scmp.eq.s32.totalorder %s17, 1
      %p84 = por %p82, %p83
      %p85 = scmp.ne.s32.totalorder %s77, %s80
      %p86 = scmp.eq.s32.totalorder %s17, 0
      %p87 = por %p85, %p86
      %p88 = scmp.ne.s32.totalorder %s77, %s80
      %p89 = scmp.eq.s32.totalorder %s22, 1
      %p90 = por %p88, %p89
      %p91 = scmp.ne.s32.totalorder %s80, %s81
      %p92 = scmp.eq.s32.totalorder %s22, 0
      %p93 = por %p91, %p92
      %p94 = scmp.ne.s32.totalorder %s80, %s81
      %p95 = scmp.eq.s32.totalorder %s23, 1
      %p96 = por %p94, %p95
      %p98 = scmp.ne.s32.totalorder %s81, %s97
      %p99 = scmp.eq.s32.totalorder %s23, 0
      %p100 = por %p98, %p99
      %s101 = ssub.s32 %s24, %s36
      %p102 = scmp.eq.s32.totalorder %s101, 0
      %s104 = sadd.s32 %s103, 1
      %s105 = scalar_select %p102, %s103, %s104
      %p108 = pneg %p102
      %p109 = scmp.eq.s32.totalorder %s17, 1
      %p110 = por %p108, %p109
      %p111 = scmp.ne.s32.totalorder %s103, %s106
      %p112 = scmp.eq.s32.totalorder %s17, 0
      %p113 = por %p111, %p112
      %p114 = scmp.ne.s32.totalorder %s103, %s106
      %p115 = scmp.eq.s32.totalorder %s22, 1
      %p116 = por %p114, %p115
      %p117 = scmp.ne.s32.totalorder %s106, %s107
      %p118 = scmp.eq.s32.totalorder %s22, 0
      %p119 = por %p117, %p118
      %p120 = scmp.ne.s32.totalorder %s106, %s107
      %p121 = scmp.eq.s32.totalorder %s23, 1
      %p122 = por %p120, %p121
      %p124 = scmp.ne.s32.totalorder %s107, %s123
      %p125 = scmp.eq.s32.totalorder %s23, 0
      %p126 = por %p124, %p125
      %p127 = scmp.le.s32.totalorder 1, %s17
      %p128 = scmp.lt.s32.totalorder %s17, 3
      %p129 = pnand %p127, %p128
      %p130 = pneg %p129
      // Predicated region
      $region9: #{tpu_custom_call.1} parent=5 // pred_check
        _
      $region10: #{tpu_custom_call.1} parent=5 // pred_check_branch
        %132 = sbr.rel (%p129) target = $region12
      $region11: #{tpu_custom_call.1} parent=5 // pred_region
        %s133 = ssub.s32 %s17, 1
      $region12: #{tpu_custom_call.1} parent=5 // pred_fallthru
        _
      %p134 = scmp.lt.s32.totalorder %s17, 2
      // Predicated region
      $region13: #{tpu_custom_call.1} parent=5 // pred_check
        %p135 = pneg %p134
      $region14: #{tpu_custom_call.1} parent=5 // pred_check_branch
        %137 = sbr.rel (%p135) target = $region16
      $region15: #{tpu_custom_call.1} parent=5 // pred_region
        // Predicated region
        $region17: #{tpu_custom_call.1} parent=15 // pred_check
          %p138 = pneg %p55
        $region18: #{tpu_custom_call.1} parent=15 // pred_check_branch
          %140 = sbr.rel (%p138) target = $region20
        $region19: #{tpu_custom_call.1} parent=15 // pred_region
          %s141 = sand.u32 %s45, 1
          %s142 = scalar_lea.sflag [#allocation4], %s141
          %s143 = sand.u32 %s45, 1
          %s144 = smul.addr %s143, 8
          %s145 = scalar_lea.vmem [#allocation3], %s144
          %s146 = sadd.s32 %s24, %s25
          %p147 = scmp.lt.s32.totalorder %s146, 1
          %s148 = scalar_select %p147, %s146, 1
          %s150 = ssub.s32 128, 128
          %151 = vsyncadd %s142, %s150
          %s152 = smul.addr %s148, 128
          %s153 = scalar_lea.hbm %s0, %s152
          %s155 = sshll.u32 %s145, 4
          %s156 = int_to_ptr.vmem [resolvable:$true] %s155
          %158 = dma.hbm_to_vmem [thread:$0]  %s153, 128, %s156, %s142
        $region20: #{tpu_custom_call.1} parent=15 // pred_fallthru
          _
        // Predicated region
        $region21: #{tpu_custom_call.1} parent=15 // pred_check
          %p159 = pneg %p87
        $region22: #{tpu_custom_call.1} parent=15 // pred_check_branch
          %161 = sbr.rel (%p159) target = $region24
        $region23: #{tpu_custom_call.1} parent=15 // pred_region
          %s162 = sand.u32 %s77, 1
          %s163 = scalar_lea.sflag [#allocation7], %s162
          %s164 = sand.u32 %s77, 1
          %s165 = smul.addr %s164, 8
          %s166 = scalar_lea.vmem [#allocation6], %s165
          %s167 = sadd.s32 %s24, %s25
          %p168 = scmp.lt.s32.totalorder %s167, 1
          %s169 = scalar_select %p168, %s167, 1
          %s171 = ssub.s32 128, 128
          %172 = vsyncadd %s163, %s171
          %s173 = smul.addr %s169, 128
          %s174 = scalar_lea.hbm %s1, %s173
          %s176 = sshll.u32 %s166, 4
          %s177 = int_to_ptr.vmem [resolvable:$true] %s176
          %179 = dma.hbm_to_vmem [thread:$0]  %s174, 128, %s177, %s163
        $region24: #{tpu_custom_call.1} parent=15 // pred_fallthru
          _
      $region16: #{tpu_custom_call.1} parent=5 // pred_fallthru
        _
      %p180 = scmp.le.s32.totalorder 1, %s17
      %p181 = scmp.lt.s32.totalorder %s17, 3
      %p182 = pnand %p180, %p181
      %p183 = pneg %p182
      // Predicated region
      $region25: #{tpu_custom_call.1} parent=5 // pred_check
        _
      $region26: #{tpu_custom_call.1} parent=5 // pred_check_branch
        %185 = sbr.rel (%p182) target = $region28
      $region27: #{tpu_custom_call.1} parent=5 // pred_region
        %s186 = ssub.s32 %s17, 1
        %s187 = sand.u32 %s48, 1
        %s188 = scalar_lea.sflag [#allocation4], %s187
        %s189 = sand.u32 %s48, 1
        %s190 = smul.addr %s189, 8
        %s191 = scalar_lea.vmem [#allocation3], %s190
        // Predicated region
        $region29: #{tpu_custom_call.1} parent=27 // pred_check
          %p192 = pneg %p61
        $region30: #{tpu_custom_call.1} parent=27 // pred_check_branch
          %194 = sbr.rel (%p192) target = $region32
        $region31: #{tpu_custom_call.1} parent=27 // pred_region
          %195 = dma.done %s188, 128
        $region32: #{tpu_custom_call.1} parent=27 // pred_fallthru
          _
        %s196 = sand.u32 %s80, 1
        %s197 = scalar_lea.sflag [#allocation7], %s196
        %s198 = sand.u32 %s80, 1
        %s199 = smul.addr %s198, 8
        %s200 = scalar_lea.vmem [#allocation6], %s199
        // Predicated region
        $region33: #{tpu_custom_call.1} parent=27 // pred_check
          %p201 = pneg %p93
        $region34: #{tpu_custom_call.1} parent=27 // pred_check_branch
          %203 = sbr.rel (%p201) target = $region36
        $region35: #{tpu_custom_call.1} parent=27 // pred_region
          %204 = dma.done %s197, 128
        $region36: #{tpu_custom_call.1} parent=27 // pred_fallthru
          _
        %s205 = sand.u32 %s48, 1
        %s206 = scalar_lea.sflag [#allocation4], %s205
        %s207 = sand.u32 %s48, 1
        %s208 = smul.addr %s207, 8
        %s209 = scalar_lea.vmem [#allocation3], %s208
        %p210 = pneg %p61
        %p211 = pneg %p58
        %s212 = sand.u32 %s80, 1
        %s213 = scalar_lea.sflag [#allocation7], %s212
        %s214 = sand.u32 %s80, 1
        %s215 = smul.addr %s214, 8
        %s216 = scalar_lea.vmem [#allocation6], %s215
        %p217 = pneg %p93
        %p218 = pneg %p90
        %p219 = pneg %p119
        %p220 = pneg %p116
        %s221 = sand.u32 %s106, 1
        %s222 = scalar_lea.sflag [#allocation5], %s221
        %s223 = sand.u32 %s106, 1
        %s224 = smul.addr %s223, 8
        %s225 = scalar_lea.vmem [#allocation8], %s224
        %s226 = sadd.s32 %s26, %s27
        %p227 = scmp.lt.s32.totalorder %s226, 1
        %s228 = scalar_select %p227, %s226, 1
        %s229 = sadd.s32 %s26, %s27
        %p230 = scmp.lt.s32.totalorder %s229, 1
        %s231 = scalar_select %p230, %s229, 1
        %p232 = scmp.eq.s32.totalorder %s27, 0
        // Predicated region
        $region37: #{tpu_custom_call.1} parent=27 // pred_check
          %p233 = pneg %p232
        $region38: #{tpu_custom_call.1} parent=27 // pred_check_branch
          %235 = sbr.rel (%p233) target = $region40
        $region39: #{tpu_custom_call.1} parent=27 // pred_region
          %236 = vst [vmem:[#allocation2] sm:$0xff] 0.0
        $region40: #{tpu_custom_call.1} parent=27 // pred_fallthru
          _
        %v237 = vld [vmem:[%s191] sm:$0xff]
        %v238 = vld [vmem:[%s200] sm:$0xff]
        %v239 = vand.u32 2147483647, %v237
        %v240 = vsub.f32 0.0, %v239
        %v241 = vmul.f32 %v240, 1.442695
        %v242 = vpow.pop %v241
        %v243 = vmax.f32 %v237, 0.0
        %v244 = vmul.f32 %v237, %v238
        %v245 = vsub.f32 %v243, %v244
        %v246 = vadd.f32 %v242, 1.0
        %v247 = vlog2.pop %v246
        %v248 = vmul.f32 %v247, 0.6931472
        %v249 = vmul.f32 -0.5, %v242
        %v250 = vadd.f32 %v249, 1.0
        %v251 = vmul.f32 %v250, %v242
        %v252 = vand.u32 2147483647, %v242
        %vm253 = vcmp.lt.f32.partialorder %v252, 0.0004427343
        %v254 = vsel %vm253, %v251, %v248
        %v255 = vadd.f32 %v245, %v254
        %v256 = vadd.f32 %v242, 1.0
        %v257 = vrcp.pop %v256
        %v258 = vmul.f32 1.0, %v257
        %vm259 = vcmp.ge.f32.partialorder %v237, 0.0
        %v260 = vmul.f32 %v242, %v258
        %v261 = vsel %vm259, %v258, %v260
        %v262 = vadd.f32 %v238, %v261
        %v263 = vmul.f32 %v238, %v261
        %v264 = vmul.f32 %v263, 2.0
        %v265 = vsub.f32 %v262, %v264
        %v266 = vmul.f32 %v238, -0.5
        %v267 = vadd.f32 %v266, 0.75
        %v268 = vmul.f32 %v255, %v267
        %v269 = vmul.f32 %v265, %v265
        %v270 = vmul.f32 %v268, %v269
        %v271 = vld [vmem:[#allocation2] sm:$0xff]
        %v272 = vadd.f32 %v270, 0.0
        %v273 = vadd.f32 %v271, %v272
        %274 = vst [vmem:[#allocation2] sm:$0xff] %v273
        // Predicated region
        $region41: #{tpu_custom_call.1} parent=27 // pred_check
          %p275 = pneg %p232
        $region42: #{tpu_custom_call.1} parent=27 // pred_check_branch
          %277 = sbr.rel (%p275) target = $region44
        $region43: #{tpu_custom_call.1} parent=27 // pred_region
          %v278 = vld [vmem:[#allocation2] sm:$0xff]
          %279 = vst [vmem:[%s225] sm:$0xff] %v278
        $region44: #{tpu_custom_call.1} parent=27 // pred_fallthru
          _
        %s280 = sand.u32 %s106, 1
        %s281 = scalar_lea.sflag [#allocation5], %s280
        %s282 = sand.u32 %s106, 1
        %s283 = smul.addr %s282, 8
        %s284 = scalar_lea.vmem [#allocation8], %s283
        // Predicated region
        $region45: #{tpu_custom_call.1} parent=27 // pred_check
          %p285 = pneg %p116
        $region46: #{tpu_custom_call.1} parent=27 // pred_check_branch
          %287 = sbr.rel (%p285) target = $region48
        $region47: #{tpu_custom_call.1} parent=27 // pred_region
          %s289 = ssub.s32 128, 128
          %290 = vsyncadd %s281, %s289
          %s291 = smul.addr %s26, 128
          %s292 = scalar_lea.hbm %s2, %s291
          %s294 = sshll.u32 %s284, 4
          %s295 = int_to_ptr.vmem [resolvable:$true] %s294
          %297 = dma.vmem_to_hbm [thread:$0]  %s295, 128, %s292, %s281
        $region48: #{tpu_custom_call.1} parent=27 // pred_fallthru
          _
      $region28: #{tpu_custom_call.1} parent=5 // pred_fallthru
        _
      %p298 = scmp.le.s32.totalorder 2, %s17
      // Predicated region
      $region49: #{tpu_custom_call.1} parent=5 // pred_check
        %p299 = pneg %p298
      $region50: #{tpu_custom_call.1} parent=5 // pred_check_branch
        %301 = sbr.rel (%p299) target = $region52
      $region51: #{tpu_custom_call.1} parent=5 // pred_region
        %s302 = ssub.s32 %s17, 2
        // Predicated region
        $region53: #{tpu_custom_call.1} parent=51 // pred_check
          %p303 = pneg %p122
        $region54: #{tpu_custom_call.1} parent=51 // pred_check_branch
          %305 = sbr.rel (%p303) target = $region56
        $region55: #{tpu_custom_call.1} parent=51 // pred_region
          %s306 = sand.u32 %s107, 1
          %s307 = scalar_lea.sflag [#allocation5], %s306
          %s308 = sand.u32 %s107, 1
          %s309 = smul.addr %s308, 8
          %s310 = scalar_lea.vmem [#allocation8], %s309
          %311 = dma.done %s307, 128
        $region56: #{tpu_custom_call.1} parent=51 // pred_fallthru
          _
      $region52: #{tpu_custom_call.1} parent=5 // pred_fallthru
        _
    $region6: #{tpu_custom_call.1} parent=1 // loop_footer
      %s21 = sadd.s32 1, %s17
    $region7: #{tpu_custom_call.1} parent=1 // loop_footer_branch
      %16 = sbr.rel target = $region3
    $region8: #{tpu_custom_call.1} parent=1 // loop_exit
      _
    %312 = vsyncpa [#allocation4], 1
    %s313 = scalar_lea.sflag [#allocation4], 1
    %314 = vsyncpa %s313, 1
    %315 = vsyncpa [#allocation7], 1
    %s316 = scalar_lea.sflag [#allocation7], 1
    %317 = vsyncpa %s316, 1
    %318 = vsyncpa [#allocation5], 1
    %s319 = scalar_lea.sflag [#allocation5], 1
    %320 = vsyncpa %s319, 1

</llo_original>
